<compile_context>
chip_gen: v7x
topology: tpu7x:2x2x1
jax: 0.10.0
libtpu: 0.0.40
codegen_flags: <defaults>
</compile_context>

<pallas_src>
import jax
import jax.numpy as jnp
from jax.experimental import pallas as pl
from jax.experimental.pallas import tpu as pltpu


def _pick_tn(d_out, max_tn=512):
    """Output-feature tile width.

    Small / non-128-multiple d_out -> one full-width (unpadded) tile: stores may be
    lane-masked but write only useful bytes and need no wrapper slice. Large d_out ->
    a 128/256-multiple divisor so stores stay lane-dense and W tiles stay small.
    """
    if d_out <= max_tn:
        return d_out
    for tn in (512, 384, 256, 128):
        if d_out % tn == 0:
            return tn
    return d_out  # odd large d_out: single full-width tile


def _spec(shape, index_map, pipeline_mode=None):
    if pipeline_mode is None:
        return pl.BlockSpec(shape, index_map)
    return pl.BlockSpec(shape, index_map, pipeline_mode=pipeline_mode)


def _traj_kernel(x_ref, w_ref, b_ref, s_ref, o_ref):
    # x_ref : (1, L, d_in)   f32  (cast to bf16 in-kernel -> fused with input DMA)
    # w_ref : (d_in, tn)     bf16 weight tile
    # b_ref : (1, tn)        f32  bias tile
    # s_ref : (1, tn)        f32  start-token tile
    # o_ref : (1, L+1, tn)   f32  output block (row 0 = start token, rows 1..L = proj)
    L = x_ref.shape[1]
    x = x_ref[0].astype(jnp.bfloat16)                       # VPU cast, hidden under DMA
    acc = jnp.dot(x, w_ref[...],
                  preferred_element_type=jnp.float32)        # MXU, f32 accumulate
    o_ref[0, 0:1, :] = s_ref[...]                            # start-token row (once per block)
    o_ref[0, pl.ds(1, L), :] = (acc + b_ref[...]).astype(o_ref.dtype)


def trajectory_encoder(x, weight, bias, start_tok):
    """x: [B, L, d_in] f32; weight: [d_in, d_out]; bias: [d_out]; start_tok: [d_out].

    Returns logits: [B, L + 1, d_out] f32.
    """
    B, L, d_in = x.shape
    d_out = weight.shape[1]

    tn = _pick_tn(d_out)
    n_tiles = d_out // tn

    # One-time tiny parameter casts / reshapes (negligible next to activation traffic).
    w_bf = weight.astype(jnp.bfloat16)
    b2 = bias.astype(jnp.float32).reshape(1, d_out)
    s2 = start_tok.astype(jnp.float32).reshape(1, d_out)

    # Grid-invariant operands (single N tile) -> single-buffer them.
    wb_mode = pl.Buffered(1) if n_tiles == 1 else None

    # Per-step VMEM footprint (incl. pipeline buffers) -> explicit scoped limit.
    x_blk = L * d_in * 4
    w_blk = d_in * tn * 2
    o_blk = (L + 1) * tn * 4
    small_blk = tn * 4
    w_bufs = 1 if n_tiles == 1 else 2
    need = 2 * x_blk + w_bufs * w_blk + 2 * o_blk + 2 * w_bufs * 2 * small_blk
    vmem_limit = int(min(96 * 2**20, max(2 * need + (1 << 20), 16 * 2**20)))

    cost = pl.CostEstimate(
        flops=2 * B * L * d_in * d_out,
        transcendentals=0,
        bytes_accessed=(B * L * d_in * 4            # x read (f32)
                        + B * d_in * d_out * 2      # W read per batch (worst case)
                        + B * (L + 1) * d_out * 4), # logits write (unpadded)
    )

    return pl.pallas_call(
        _traj_kernel,
        out_shape=jax.ShapeDtypeStruct((B, L + 1, d_out), jnp.float32),
        grid_spec=pltpu.PrefetchScalarGridSpec(
            num_scalar_prefetch=0,
            grid=(B, n_tiles),
            in_specs=[
                _spec((1, L, d_in), lambda b, n: (b, 0, 0)),
                _spec((d_in, tn), lambda b, n: (0, n), wb_mode),
                _spec((1, tn), lambda b, n: (0, n), wb_mode),
                _spec((1, tn), lambda b, n: (0, n), wb_mode),
            ],
            out_specs=pl.BlockSpec((1, L + 1, tn), lambda b, n: (b, 0, n)),
        ),
        compiler_params=pltpu.CompilerParams(
            dimension_semantics=("parallel", "parallel"),
            vmem_limit_bytes=vmem_limit),
        cost_estimate=cost,
    )(x, w_bf, b2, s2)


if __name__ == "__main__":
    B, L, d_in, d_out = 2, 8, 16, 32

    key = jax.random.PRNGKey(0)
    kx, kw, kb, ks = jax.random.split(key, 4)

    # Deterministic parameter init (nn.Linear-style uniform bound).
    bound = 1.0 / (d_in ** 0.5)
    x = jax.random.normal(kx, (B, L, d_in), dtype=jnp.float32)
    weight = jax.random.uniform(kw, (d_in, d_out), jnp.float32, -bound, bound)
    bias = jax.random.uniform(kb, (d_out,), jnp.float32, -bound, bound)
    start_tok = jax.random.normal(ks, (d_out,), dtype=jnp.float32) * 0.02

    fn = jax.jit(trajectory_encoder)
    out = jax.block_until_ready(fn(x, weight, bias, start_tok))

    # Reference check in plain JAX (same bf16-operand / f32-accumulate precision path).
    ref_proj = (jnp.dot(x.astype(jnp.bfloat16).reshape(B * L, d_in),
                        weight.astype(jnp.bfloat16),
                        preferred_element_type=jnp.float32)
                .reshape(B, L, d_out) + bias)
    ref = jnp.concatenate(
        [jnp.broadcast_to(start_tok, (B, 1, d_out)), ref_proj], axis=1)

    assert out.shape == (B, L + 1, d_out), out.shape
    assert jnp.allclose(out, ref, atol=2e-3, rtol=2e-3)

    print("KERNEL_OK")
</pallas_src>

<mosaic_0001>
module attributes {stable_mosaic.version = 11 : i64} {
  func.func @_traj_kernel(%arg0: i32, %arg1: i32, %arg2: memref<1x8x16xf32, #tpu.memory_space<vmem>>, %arg3: memref<16x32xbf16, #tpu.memory_space<vmem>>, %arg4: memref<1x32xf32, #tpu.memory_space<vmem>>, %arg5: memref<1x32xf32, #tpu.memory_space<vmem>>, %arg6: memref<1x9x32xf32, #tpu.memory_space<vmem>>) attributes {dimension_semantics = [#tpu.dimension_semantics<parallel>, #tpu.dimension_semantics<parallel>], iteration_bounds = array<i64: 2, 1>, scalar_prefetch = 0 : i64, scratch_operands = 0 : i64, tpu.core_type = #tpu.core_type<tc>, window_params = [{transform_indices = @transform_0, window_bounds = array<i64: 1, 8, 16>}, {pipeline_mode = #tpu.pipeline_mode<synchronous>, transform_indices = @transform_1, window_bounds = array<i64: 16, 32>}, {pipeline_mode = #tpu.pipeline_mode<synchronous>, transform_indices = @transform_2, window_bounds = array<i64: 1, 32>}, {pipeline_mode = #tpu.pipeline_mode<synchronous>, transform_indices = @transform_3, window_bounds = array<i64: 1, 32>}, {transform_indices = @transform_4, window_bounds = array<i64: 1, 9, 32>}]} {
    %c0 = arith.constant 0 : index
    %c0_0 = arith.constant 0 : index
    %c0_1 = arith.constant 0 : index
    %0 = vector.load %arg2[%c0, %c0_0, %c0_1] : memref<1x8x16xf32, #tpu.memory_space<vmem>>, vector<1x8x16xf32>
    %1 = vector.shape_cast %0 : vector<1x8x16xf32> to vector<8x16xf32>
    %2 = arith.truncf %1 : vector<8x16xf32> to vector<8x16xbf16>
    %c0_2 = arith.constant 0 : index
    %c0_3 = arith.constant 0 : index
    %3 = vector.load %arg3[%c0_2, %c0_3] : memref<16x32xbf16, #tpu.memory_space<vmem>>, vector<16x32xbf16>
    %cst = arith.constant dense<0.000000e+00> : vector<8x32xf32>
    %4 = tpu.matmul %2, %3, %cst {dimension_numbers = #tpu.dot_dimension_numbers<[1], [0], [0], [1], [0, 0, 1, 1], [], []>} : vector<8x16xbf16>, vector<16x32xbf16>, vector<8x32xf32> -> vector<8x32xf32>
    %c0_4 = arith.constant 0 : index
    %c0_5 = arith.constant 0 : index
    %5 = vector.load %arg5[%c0_4, %c0_5] : memref<1x32xf32, #tpu.memory_space<vmem>>, vector<1x32xf32>
    %c0_6 = arith.constant 0 : index
    %c0_7 = arith.constant 0 : index
    %c0_8 = arith.constant 0 : index
    %6 = vector.load %arg6[%c0_6, %c0_7, %c0_8] : memref<1x9x32xf32, #tpu.memory_space<vmem>>, vector<1x1x32xf32>
    %7 = vector.shape_cast %6 : vector<1x1x32xf32> to vector<1x32xf32>
    %8 = vector.shape_cast %5 : vector<1x32xf32> to vector<1x1x32xf32>
    tpu.vector_store %arg6[%c0_6, %c0_7, %c0_8], %8 {strides = array<i32>} : memref<1x9x32xf32, #tpu.memory_space<vmem>>, vector<1x1x32xf32>,
    %c0_9 = arith.constant 0 : index
    %c0_10 = arith.constant 0 : index
    %9 = vector.load %arg4[%c0_9, %c0_10] : memref<1x32xf32, #tpu.memory_space<vmem>>, vector<1x32xf32>
    %10 = vector.broadcast %9 : vector<1x32xf32> to vector<8x32xf32>
    %11 = arith.addf %4, %10 : vector<8x32xf32>
    %c0_11 = arith.constant 0 : index
    %c1 = arith.constant 1 : index
    %c0_12 = arith.constant 0 : index
    %12 = vector.load %arg6[%c0_11, %c1, %c0_12] : memref<1x9x32xf32, #tpu.memory_space<vmem>>, vector<1x8x32xf32>
    %13 = vector.shape_cast %12 : vector<1x8x32xf32> to vector<8x32xf32>
    %14 = vector.shape_cast %11 : vector<8x32xf32> to vector<1x8x32xf32>
    tpu.vector_store %arg6[%c0_11, %c1, %c0_12], %14 {strides = array<i32>} : memref<1x9x32xf32, #tpu.memory_space<vmem>>, vector<1x8x32xf32>,
    return
  }
  func.func @transform_0(%arg0: i32, %arg1: i32) -> (i32, i32, i32) {
    %c0_i32 = arith.constant 0 : i32
    %c0_i32_0 = arith.constant 0 : i32
    %c0_i32_1 = arith.constant 0 : i32
    return %arg0, %c0_i32, %c0_i32_0 : i32, i32, i32
  }
  func.func @transform_1(%arg0: i32, %arg1: i32) -> (i32, i32) {
    %c0_i32 = arith.constant 0 : i32
    %c0_i32_0 = arith.constant 0 : i32
    return %c0_i32, %arg1 : i32, i32
  }
  func.func @transform_2(%arg0: i32, %arg1: i32) -> (i32, i32) {
    %c0_i32 = arith.constant 0 : i32
    %c0_i32_0 = arith.constant 0 : i32
    return %c0_i32, %arg1 : i32, i32
  }
  func.func @transform_3(%arg0: i32, %arg1: i32) -> (i32, i32) {
    %c0_i32 = arith.constant 0 : i32
    %c0_i32_0 = arith.constant 0 : i32
    return %c0_i32, %arg1 : i32, i32
  }
  func.func @transform_4(%arg0: i32, %arg1: i32) -> (i32, i32, i32) {
    %c0_i32 = arith.constant 0 : i32
    %c0_i32_0 = arith.constant 0 : i32
    return %arg0, %c0_i32, %arg1 : i32, i32, i32
  }
}

</mosaic_0001>

<llo_original>
// kernel: trajectory_encoder.1
$region0: #{trajectory_encoder.1}
  #allocation0 [shape = 'u32[]', space=smem, size = 0x4, offset = 0x4, fixed_abs, tag = 'smem constant byte address 0x4 - core index']
  #allocation1 [shape = 'u32[144,128]{1,0:T(1,128)}', space=vmem, size = 0x12000, scoped, tag = 'internal scratch']
  %s0 = inlined_call_operand.vmem [shape: f32[2,8,16], index: 0, kind: input, shape index: {}]
  %s1 = inlined_call_operand.vmem [shape: bf16[16,32], index: 1, kind: input, shape index: {}]
  %s2 = inlined_call_operand.vmem [shape: f32[1,32], index: 2, kind: input, shape index: {}]
  %s3 = inlined_call_operand.vmem [shape: f32[1,32], index: 3, kind: input, shape index: {}]
  %s4 = inlined_call_operand.vmem [shape: f32[2,9,32], index: 4, kind: output, shape index: {}]
  %s5 = sld [smem:[#allocation0]]
  $region49: #{trajectory_encoder.1} parent=0
    _
  %s7 = ssub.s32 1, %s5
  %s8 = scalar_select 0, %s7, %s5
  loop: start=0, step=1, limit=4
  $region2: #{trajectory_encoder.1} parent=0 // loop_pre_header
    _
  $region3: #{trajectory_encoder.1} parent=0 // loop_header
    %s10 = sphi 0, %s14
    %p11 = scmp.ge.s32.totalorder %s10, 4
    %s17 = sphi 0, %s29
    %s18 = sphi 0, %s25
    %s19 = sphi 0, %s17
    %s20 = sphi 0, %s18
    %s21 = sphi 0, %s19
    %s22 = sphi 0, %s20
    %s32 = sphi 0, %s34
    %s35 = sphi 0, %s32
    %s36 = sphi 0, %s35
    %s52 = sphi 0, %s36
    %s58 = sphi 0, %s60
    %s61 = sphi 0, %s58
    %s62 = sphi 0, %s61
    %s78 = sphi 0, %s62
    %s84 = sphi 0, %s86
    %s87 = sphi 0, %s84
    %s88 = sphi 0, %s87
    %s104 = sphi 0, %s88
    %s110 = sphi 0, %s112
    %s113 = sphi 0, %s110
    %s114 = sphi 0, %s113
    %s130 = sphi 0, %s114
    %s138 = sphi 0, %s140
    %s141 = sphi 0, %s138
    %s142 = sphi 0, %s141
    %s158 = sphi 0, %s142
  $region4: #{trajectory_encoder.1} parent=0 // loop_header_branch
    %13 = sbr.rel (%p11) target = $region8
  $region5: #{trajectory_encoder.1} parent=0 // loop_body
    %s15 = ssub.s32 %s10, 1
    %s16 = ssub.s32 %s10, 2
    %s23 = sadd.s32 1, %s18
    %p24 = scmp.ge.s32.totalorder %s23, 1
    %s25 = scalar_select %p24, 0, %s23
    %s26 = sadd.s32 1, %s17
    %s27 = scalar_select %p24, %s26, %s17
    %p28 = scmp.ge.s32.totalorder %s27, 2
    %s29 = scalar_select %p28, 0, %s27
    %s30 = ssub.s32 %s17, %s29
    %p31 = scmp.eq.s32.totalorder %s30, 0
    %s33 = sadd.s32 %s32, 1
    %s34 = scalar_select %p31, %s32, %s33
    %p37 = pneg %p31
    %p38 = scmp.eq.s32.totalorder %s10, 1
    %p39 = por %p37, %p38
    %p40 = scmp.ne.s32.totalorder %s32, %s35
    %p41 = scmp.eq.s32.totalorder %s10, 0
    %p42 = por %p40, %p41
    %p43 = scmp.ne.s32.totalorder %s32, %s35
    %p44 = scmp.eq.s32.totalorder %s15, 1
    %p45 = por %p43, %p44
    %p46 = scmp.ne.s32.totalorder %s35, %s36
    %p47 = scmp.eq.s32.totalorder %s15, 0
    %p48 = por %p46, %p47
    %p49 = scmp.ne.s32.totalorder %s35, %s36
    %p50 = scmp.eq.s32.totalorder %s16, 1
    %p51 = por %p49, %p50
    %p53 = scmp.ne.s32.totalorder %s36, %s52
    %p54 = scmp.eq.s32.totalorder %s16, 0
    %p55 = por %p53, %p54
    %s56 = ssub.s32 %s18, %s25
    %p57 = scmp.eq.s32.totalorder %s56, 0
    %s59 = sadd.s32 %s58, 1
    %s60 = scalar_select %p57, %s58, %s59
    %p63 = pneg %p57
    %p64 = scmp.eq.s32.totalorder %s10, 1
    %p65 = por %p63, %p64
    %p66 = scmp.ne.s32.totalorder %s58, %s61
    %p67 = scmp.eq.s32.totalorder %s10, 0
    %p68 = por %p66, %p67
    %p69 = scmp.ne.s32.totalorder %s58, %s61
    %p70 = scmp.eq.s32.totalorder %s15, 1
    %p71 = por %p69, %p70
    %p72 = scmp.ne.s32.totalorder %s61, %s62
    %p73 = scmp.eq.s32.totalorder %s15, 0
    %p74 = por %p72, %p73
    %p75 = scmp.ne.s32.totalorder %s61, %s62
    %p76 = scmp.eq.s32.totalorder %s16, 1
    %p77 = por %p75, %p76
    %p79 = scmp.ne.s32.totalorder %s62, %s78
    %p80 = scmp.eq.s32.totalorder %s16, 0
    %p81 = por %p79, %p80
    %s82 = ssub.s32 %s18, %s25
    %p83 = scmp.eq.s32.totalorder %s82, 0
    %s85 = sadd.s32 %s84, 1
    %s86 = scalar_select %p83, %s84, %s85
    %p89 = pneg %p83
    %p90 = scmp.eq.s32.totalorder %s10, 1
    %p91 = por %p89, %p90
    %p92 = scmp.ne.s32.totalorder %s84, %s87
    %p93 = scmp.eq.s32.totalorder %s10, 0
    %p94 = por %p92, %p93
    %p95 = scmp.ne.s32.totalorder %s84, %s87
    %p96 = scmp.eq.s32.totalorder %s15, 1
    %p97 = por %p95, %p96
    %p98 = scmp.ne.s32.totalorder %s87, %s88
    %p99 = scmp.eq.s32.totalorder %s15, 0
    %p100 = por %p98, %p99
    %p101 = scmp.ne.s32.totalorder %s87, %s88
    %p102 = scmp.eq.s32.totalorder %s16, 1
    %p103 = por %p101, %p102
    %p105 = scmp.ne.s32.totalorder %s88, %s104
    %p106 = scmp.eq.s32.totalorder %s16, 0
    %p107 = por %p105, %p106
    %s108 = ssub.s32 %s18, %s25
    %p109 = scmp.eq.s32.totalorder %s108, 0
    %s111 = sadd.s32 %s110, 1
    %s112 = scalar_select %p109, %s110, %s111
    %p115 = pneg %p109
    %p116 = scmp.eq.s32.totalorder %s10, 1
    %p117 = por %p115, %p116
    %p118 = scmp.ne.s32.totalorder %s110, %s113
    %p119 = scmp.eq.s32.totalorder %s10, 0
    %p120 = por %p118, %p119
    %p121 = scmp.ne.s32.totalorder %s110, %s113
    %p122 = scmp.eq.s32.totalorder %s15, 1
    %p123 = por %p121, %p122
    %p124 = scmp.ne.s32.totalorder %s113, %s114
    %p125 = scmp.eq.s32.totalorder %s15, 0
    %p126 = por %p124, %p125
    %p127 = scmp.ne.s32.totalorder %s113, %s114
    %p128 = scmp.eq.s32.totalorder %s16, 1
    %p129 = por %p127, %p128
    %p131 = scmp.ne.s32.totalorder %s114, %s130
    %p132 = scmp.eq.s32.totalorder %s16, 0
    %p133 = por %p131, %p132
    %s134 = ssub.s32 %s17, %s29
    %s135 = ssub.s32 %s18, %s25
    %s136 = sor.u32 %s134, %s135
    %p137 = scmp.eq.s32.totalorder %s136, 0
    %s139 = sadd.s32 %s138, 1
    %s140 = scalar_select %p137, %s138, %s139
    %p143 = pneg %p137
    %p144 = scmp.eq.s32.totalorder %s10, 1
    %p145 = por %p143, %p144
    %p146 = scmp.ne.s32.totalorder %s138, %s141
    %p147 = scmp.eq.s32.totalorder %s10, 0
    %p148 = por %p146, %p147
    %p149 = scmp.ne.s32.totalorder %s138, %s141
    %p150 = scmp.eq.s32.totalorder %s15, 1
    %p151 = por %p149, %p150
    %p152 = scmp.ne.s32.totalorder %s141, %s142
    %p153 = scmp.eq.s32.totalorder %s15, 0
    %p154 = por %p152, %p153
    %p155 = scmp.ne.s32.totalorder %s141, %s142
    %p156 = scmp.eq.s32.totalorder %s16, 1
    %p157 = por %p155, %p156
    %p159 = scmp.ne.s32.totalorder %s142, %s158
    %p160 = scmp.eq.s32.totalorder %s16, 0
    %p161 = por %p159, %p160
    %p162 = scmp.le.s32.totalorder 1, %s10
    %p163 = scmp.lt.s32.totalorder %s10, 3
    %p164 = pnand %p162, %p163
    %p165 = pneg %p164
    // Predicated region
    $region9: #{trajectory_encoder.1} parent=5 // pred_check
      _
    $region10: #{trajectory_encoder.1} parent=5 // pred_check_branch
      %167 = sbr.rel (%p164) target = $region12
    $region11: #{trajectory_encoder.1} parent=5 // pred_region
      %s168 = ssub.s32 %s10, 1
      // Predicated region
      $region13: #{trajectory_encoder.1} parent=11 // pred_check
        %p169 = pneg %p74
      $region14: #{trajectory_encoder.1} parent=11 // pred_check_branch
        %171 = sbr.rel (%p169) target = $region16
      $region15: #{trajectory_encoder.1} parent=11 // pred_region
        %p172 = scmp.lt.s32.totalorder %s20, 0
        %s173 = scalar_select %p172, %s20, 0
        %s174 = smul.addr %s173, 4
        %s175 = scalar_lea.vmem %s1, %s174
      $region16: #{trajectory_encoder.1} parent=11 // pred_fallthru
        _
      // Predicated region
      $region17: #{trajectory_encoder.1} parent=11 // pred_check
        %p176 = pneg %p100
      $region18: #{trajectory_encoder.1} parent=11 // pred_check_branch
        %178 = sbr.rel (%p176) target = $region20
      $region19: #{trajectory_encoder.1} parent=11 // pred_region
        %p179 = scmp.lt.s32.totalorder %s20, 0
        %s180 = scalar_select %p179, %s20, 0
        %s181 = scalar_lea.vmem %s2, %s180
      $region20: #{trajectory_encoder.1} parent=11 // pred_fallthru
        _
      // Predicated region
      $region21: #{trajectory_encoder.1} parent=11 // pred_check
        %p182 = pneg %p126
      $region22: #{trajectory_encoder.1} parent=11 // pred_check_branch
        %184 = sbr.rel (%p182) target = $region24
      $region23: #{trajectory_encoder.1} parent=11 // pred_region
        %p185 = scmp.lt.s32.totalorder %s20, 0
        %s186 = scalar_select %p185, %s20, 0
        %s187 = scalar_lea.vmem %s3, %s186
      $region24: #{trajectory_encoder.1} parent=11 // pred_fallthru
        _
    $region12: #{trajectory_encoder.1} parent=5 // pred_fallthru
      _
    %p188 = scmp.lt.s32.totalorder %s10, 2
    // Predicated region
    $region25: #{trajectory_encoder.1} parent=5 // pred_check
      %p189 = pneg %p188
    $region26: #{trajectory_encoder.1} parent=5 // pred_check_branch
      %191 = sbr.rel (%p189) target = $region28
    $region27: #{trajectory_encoder.1} parent=5 // pred_region
      // Predicated region
      $region29: #{trajectory_encoder.1} parent=27 // pred_check
        %p192 = pneg %p42
      $region30: #{trajectory_encoder.1} parent=27 // pred_check_branch
        %194 = sbr.rel (%p192) target = $region32
      $region31: #{trajectory_encoder.1} parent=27 // pred_region
        %p195 = scmp.lt.s32.totalorder %s17, 1
        %s196 = scalar_select %p195, %s17, 1
        %s197 = smul.addr %s196, 8
        %s198 = scalar_lea.vmem %s0, %s197
      $region32: #{trajectory_encoder.1} parent=27 // pred_fallthru
        _
    $region28: #{trajectory_encoder.1} parent=5 // pred_fallthru
      _
    %p199 = scmp.le.s32.totalorder 1, %s10
    %p200 = scmp.lt.s32.totalorder %s10, 3
    %p201 = pnand %p199, %p200
    %p202 = pneg %p201
    // Predicated region
    $region33: #{trajectory_encoder.1} parent=5 // pred_check
      _
    $region34: #{trajectory_encoder.1} parent=5 // pred_check_branch
      %204 = sbr.rel (%p201) target = $region36
    $region35: #{trajectory_encoder.1} parent=5 // pred_region
      %s205 = ssub.s32 %s10, 1
      %p206 = scmp.lt.s32.totalorder %s19, 1
      %s207 = scalar_select %p206, %s19, 1
      %s208 = smul.addr %s207, 8
      %s209 = scalar_lea.vmem %s0, %s208
      %p210 = pneg %p48
      %p211 = pneg %p45
      %p212 = scmp.lt.s32.totalorder %s20, 0
      %s213 = scalar_select %p212, %s20, 0
      %s214 = smul.addr %s213, 4
      %s215 = scalar_lea.vmem %s1, %s214
      %p216 = pneg %p74
      %p217 = pneg %p71
      %p218 = scmp.lt.s32.totalorder %s20, 0
      %s219 = scalar_select %p218, %s20, 0
      %s220 = scalar_lea.vmem %s2, %s219
      %p221 = pneg %p100
      %p222 = pneg %p97
      %p223 = scmp.lt.s32.totalorder %s20, 0
      %s224 = scalar_select %p223, %s20, 0
      %s225 = scalar_lea.vmem %s3, %s224
      %p226 = pneg %p126
      %p227 = pneg %p123
      %p228 = pneg %p154
      %p229 = pneg %p151
      %p230 = scmp.lt.s32.totalorder %s19, 1
      %s231 = scalar_select %p230, %s19, 1
      %p232 = scmp.lt.s32.totalorder %s20, 0
      %s233 = scalar_select %p232, %s20, 0
      %s234 = smul.addr %s231, 2
      %s235 = sadd.s32 %s233, %s234
      %s236 = smul.addr %s235, 8
      %s237 = scalar_lea.vmem %s4, %s236
      %p238 = scmp.lt.s32.totalorder %s19, 1
      %s239 = scalar_select %p238, %s19, 1
      %s240 = smul.addr %s239, 8
      %s241 = scalar_lea.vmem %s0, %s240
      %p242 = scmp.lt.s32.totalorder %s20, 0
      %s243 = scalar_select %p242, %s20, 0
      %s244 = smul.addr %s243, 4
      %s245 = scalar_lea.vmem %s1, %s244
      %p246 = scmp.lt.s32.totalorder %s20, 0
      %s247 = scalar_select %p246, %s20, 0
      %s248 = scalar_lea.vmem %s2, %s247
      %p249 = scmp.lt.s32.totalorder %s20, 0
      %s250 = scalar_select %p249, %s20, 0
      %s251 = scalar_lea.vmem %s3, %s250
      %p252 = scmp.lt.s32.totalorder %s19, 1
      %s253 = scalar_select %p252, %s19, 1
      %p254 = scmp.lt.s32.totalorder %s20, 0
      %s255 = scalar_select %p254, %s20, 0
      %s256 = smul.addr %s253, 2
      %s257 = sadd.s32 %s255, %s256
      %s258 = smul.addr %s257, 8
      %s259 = scalar_lea.vmem %s4, %s258
      %v261 = vld [vmem:[%s241] sm:$0xff]
      %v262 = vpack.c.bf16 %v261, %v261
      %v263 = vld [vmem:[%s245] sm:$0xf]
      %v264 = vld [vmem:[%s245 + $0x4] sm:$0xf]
      %v265 = vld [vmem:[%s251] sm:$0x1]
      %vm266 = vcmask 253952
      %267 = vst.msk [vmem:[%s259] sm:$0x1] %vm266, %v265
      %v268 = vld [vmem:[%s248] sm:$0x1]
      %v270 = vlaneseq
      %v271 = vshrl.u32 %v270, 7
      %v272 = vsub.s32 0, %v271
      %v273 = vrot.slane %v268, %v272
      %v277 = vunpack.c.l.b16 %v263
      %v278 = vunpack.c.l.b16 %v264
      %v279 = vpack.c.b16 %v278, %v277
      %vm281 = vcmask 130048
      %v283 = vsel %vm281, %v262, 0
      %285 = vmatprep.subr.bf16.mxu0 0
      %286 = vmatpush1.bf16.msra.mxu0 %v279
      %287 = vmatprep.subr.bf16.mxu0 0
      %288 = vmatpush1.bf16.msra.mxu0 0
      %289 = vmatprep.subr.bf16.mxu0 0
      %290 = vmatpush1.bf16.msra.mxu0 0
      %291 = vmatprep.subr.bf16.mxu0 0
      %292 = vmatpush1.bf16.msra.mxu0 0
      %293 = vmatprep.subr.bf16.mxu0 0
      %294 = vmatpush1.bf16.msra.mxu0 0
      %295 = vmatprep.subr.bf16.mxu0 0
      %296 = vmatpush1.bf16.msra.mxu0 0
      %297 = vmatprep.subr.bf16.mxu0 0
      %298 = vmatpush1.bf16.msra.mxu0 0
      %299 = vmatprep.subr.bf16.mxu0 0
      %300 = vmatpush1.bf16.msra.mxu0 0
      %301 = vmatprep.subr.bf16.mxu0 0
      %302 = vmatpush1.bf16.msra.mxu0 0
      %303 = vmatprep.subr.bf16.mxu0 0
      %304 = vmatpush1.bf16.msra.mxu0 0
      %305 = vmatprep.subr.bf16.mxu0 0
      %306 = vmatpush1.bf16.msra.mxu0 0
      %307 = vmatprep.subr.bf16.mxu0 0
      %308 = vmatpush1.bf16.msra.mxu0 0
      %309 = vmatprep.subr.bf16.mxu0 0
      %310 = vmatpush1.bf16.msra.mxu0 0
      %311 = vmatprep.subr.bf16.mxu0 0
      %312 = vmatpush1.bf16.msra.mxu0 0
      %313 = vmatprep.subr.bf16.mxu0 0
      %314 = vmatpush1.bf16.msra.mxu0 0
      %315 = vmatprep.subr.bf16.mxu0 0
      %316 = vmatpush1.bf16.msra.mxu0 0
      %317 = vmatprep.mubr.bf16.mxu0 0
      %318 = vmatmul.mubr.bf16.gmra.mrb[0].mxu0 %v283
      %v319 = vpop.f32.mrb[0].mxu0
      %v320 = vadd.f32 %v273, %v319
      %v321 = vpop.f32.mrb[0].mxu0
      %v322 = vpop.f32.mrb[0].mxu0
      %v323 = vpop.f32.mrb[0].mxu0
      %324 = vdwg.mxu0
      %vm325 = vcmask 261120
      %326 = vst.msk [vmem:[%s259 + $0x1] sm:$0xff] %vm325, %v320
      %p327 = scmp.lt.s32.totalorder %s19, 1
      %s328 = scalar_select %p327, %s19, 1
      %p329 = scmp.lt.s32.totalorder %s20, 0
      %s330 = scalar_select %p329, %s20, 0
      %s331 = smul.addr %s328, 2
      %s332 = sadd.s32 %s330, %s331
      %s333 = smul.addr %s332, 8
      %s334 = scalar_lea.vmem %s4, %s333
      // Predicated region
      $region37: #{trajectory_encoder.1} parent=35 // pred_check
        %p335 = pneg %p151
      $region38: #{trajectory_encoder.1} parent=35 // pred_check_branch
        %337 = sbr.rel (%p335) target = $region40
      $region39: #{trajectory_encoder.1} parent=35 // pred_region
        _
      $region40: #{trajectory_encoder.1} parent=35 // pred_fallthru
        _
    $region36: #{trajectory_encoder.1} parent=5 // pred_fallthru
      _
    %p338 = scmp.le.s32.totalorder 2, %s10
    // Predicated region
    $region41: #{trajectory_encoder.1} parent=5 // pred_check
      %p339 = pneg %p338
    $region42: #{trajectory_encoder.1} parent=5 // pred_check_branch
      %341 = sbr.rel (%p339) target = $region44
    $region43: #{trajectory_encoder.1} parent=5 // pred_region
      %s342 = ssub.s32 %s10, 2
      // Predicated region
      $region45: #{trajectory_encoder.1} parent=43 // pred_check
        %p343 = pneg %p157
      $region46: #{trajectory_encoder.1} parent=43 // pred_check_branch
        %345 = sbr.rel (%p343) target = $region48
      $region47: #{trajectory_encoder.1} parent=43 // pred_region
        %p346 = scmp.lt.s32.totalorder %s21, 1
        %s347 = scalar_select %p346, %s21, 1
        %p348 = scmp.lt.s32.totalorder %s22, 0
        %s349 = scalar_select %p348, %s22, 0
        %s350 = smul.addr %s347, 2
        %s351 = sadd.s32 %s349, %s350
        %s352 = smul.addr %s351, 8
        %s353 = scalar_lea.vmem %s4, %s352
      $region48: #{trajectory_encoder.1} parent=43 // pred_fallthru
        _
    $region44: #{trajectory_encoder.1} parent=5 // pred_fallthru
      _
  $region6: #{trajectory_encoder.1} parent=0 // loop_footer
    %s14 = sadd.s32 1, %s10
  $region7: #{trajectory_encoder.1} parent=0 // loop_footer_branch
    %9 = sbr.rel target = $region3
  $region8: #{trajectory_encoder.1} parent=0 // loop_exit
    _

</llo_original>
